<compile_context>
chip_gen: v7x
topology: tpu7x:2x2x1
jax: 0.10.0
libtpu: 0.0.40
codegen_flags: <defaults>
</compile_context>

<pallas_src>
import numpy as np
import jax
import jax.numpy as jnp
from jax.experimental import pallas as pl
from jax.experimental.pallas import tpu as pltpu


_LANE = 128


def _round_up(x, m):
    return ((x + m - 1) // m) * m


def _vmem_plan():
    """Per-generation (vmem_limit_bytes, double-buffered in+out tile budget)."""
    kind = ""
    try:
        kind = jax.devices()[0].device_kind.lower()
    except Exception:
        pass
    if ("v5" in kind) or ("v6" in kind):
        # 128 MiB physical VMEM: raise the scoped limit, take big lane tiles.
        return 64 << 20, 44 << 20
    # v7x (64 MiB physical / 32 MiB scoped default) or unknown: conservative.
    return 32 << 20, 22 << 20


def _pick_hw_tile(hw, n, c_in, c_out, in_bytes, out_bytes, *,
                  vmem_budget, target_steps=8, min_step_bytes=2 << 20):
    """Pick a lane tile T (multiple of 128) for the flattened spatial axis.

    - Respects `vmem_budget` for the double-buffered (input + output) tiles,
      accounting for sublane padding of the channel dims.
    - Prefers >= `target_steps` total grid steps (megacore / pipeline) but
      never shrinks a step below ~`min_step_bytes` of HBM traffic, where the
      ~0.35us per-step overhead would dominate.
    - Always leaves >= 2 grid steps when the spatial axis is big enough
      (v7x has two TensorCores).
    """
    hw128 = _round_up(hw, _LANE)
    c_in_p = _round_up(c_in, max(8, 32 // in_bytes))      # sublane packing
    c_out_p = _round_up(c_out, max(8, 32 // out_bytes))
    per_lane = c_in_p * in_bytes + c_out_p * out_bytes    # one in+out tile, per lane
    cap_vmem = max(_LANE, (vmem_budget // (2 * per_lane)) // _LANE * _LANE)

    t = min(hw128, cap_vmem)

    want_tiles = -(-target_steps // max(n, 1))            # ceil(target_steps / n)
    if want_tiles > 1:
        t_split = max(_LANE, (hw128 // want_tiles) // _LANE * _LANE)
        t_floor = min(t, max(_LANE, _round_up(-(-min_step_bytes // per_lane), _LANE)))
        t = min(t, max(t_split, t_floor))

    if n == 1 and t >= hw128 and hw128 >= 2 * _LANE:
        t = max(_LANE, (hw128 // 2) // _LANE * _LANE)
    return t


# ---------------------------------------------------------------------------
# Pallas kernel: y = W @ x + b on one (batch, spatial-tile) block
# ---------------------------------------------------------------------------
def _musco_svd_kernel(x_ref, w_ref, b_ref, o_ref):
    # x_ref: (1, C_in, T) native dtype; w_ref: (C_out, C_in) compute dtype;
    # b_ref: (C_out, 1) f32; o_ref: (1, C_out, T) output dtype.
    x = x_ref[0].astype(w_ref.dtype)                      # on-chip cast (VPU, free)
    y = jnp.dot(w_ref[...], x, preferred_element_type=jnp.float32)   # [C_out, T] f32
    o_ref[0] = (y + b_ref[...]).astype(o_ref.dtype)       # bias broadcasts


# ---------------------------------------------------------------------------
# One-time prep (hoisted out of the forward path) + forward wrapper
# ---------------------------------------------------------------------------
def musco_svd_prepare(w_element, w_restore, bias, *, compute_dtype=jnp.bfloat16):
    """Fold the two 1x1 convs into one channel-mixing matrix, once.

    w_element: [R, C_in, 1, 1]; w_restore: [C_out, R, 1, 1]; bias: [C_out].
    Returns (w_merged [C_out, C_in] in compute_dtype, bias [C_out, 1] f32).
    """
    R, C_in = w_element.shape[0], w_element.shape[1]
    C_out = w_restore.shape[0]
    w1 = np.asarray(w_element, np.float32).reshape(R, C_in)
    w2 = np.asarray(w_restore, np.float32).reshape(C_out, R)
    w = jnp.asarray(w2 @ w1).astype(compute_dtype)        # [C_out, C_in]
    b = jnp.asarray(np.asarray(bias, np.float32).reshape(C_out, 1))
    return w, b


def musco_svd_forward(x_nchw, w_merged, bias_col, *, out_dtype=None,
                      target_grid_steps=8):
    """x_nchw: [N, C_in, H, W]; w_merged: [C_out, C_in]; bias_col: [C_out, 1]."""
    N, C_in, H, W = x_nchw.shape
    C_out = w_merged.shape[0]
    HW = H * W
    out_dtype = x_nchw.dtype if out_dtype is None else out_dtype

    in_bytes = jnp.dtype(x_nchw.dtype).itemsize
    out_bytes = jnp.dtype(out_dtype).itemsize
    w_bytes = jnp.dtype(w_merged.dtype).itemsize

    vmem_limit, vmem_budget = _vmem_plan()
    T = _pick_hw_tile(HW, N, C_in, C_out, in_bytes, out_bytes,
                      vmem_budget=vmem_budget, target_steps=target_grid_steps)

    x = x_nchw.reshape(N, C_in, HW)           # metadata-only reshape, no HBM pass
    n_tiles = pl.cdiv(HW, T)                  # boundary tile handled by masked store
    grid = (N, n_tiles)

    cost = pl.CostEstimate(
        flops=2 * N * HW * C_out * C_in,
        transcendentals=0,
        bytes_accessed=(N * C_in * HW * in_bytes
                        + C_out * C_in * w_bytes
                        + C_out * 4
                        + N * C_out * HW * out_bytes),
    )

    out = pl.pallas_call(
        _musco_svd_kernel,
        out_shape=jax.ShapeDtypeStruct((N, C_out, HW), out_dtype),
        grid_spec=pl.GridSpec(
            grid=grid,
            in_specs=[
                pl.BlockSpec((1, C_in, T), lambda n, s: (n, 0, s)),
                pl.BlockSpec((C_out, C_in), lambda n, s: (0, 0)),
                pl.BlockSpec((C_out, 1), lambda n, s: (0, 0)),
            ],
            out_specs=pl.BlockSpec((1, C_out, T), lambda n, s: (n, 0, s)),
        ),
        compiler_params=pltpu.CompilerParams(
            dimension_semantics=("parallel", "parallel"),
            vmem_limit_bytes=vmem_limit),
        cost_estimate=cost,
    )(x, w_merged, bias_col)

    return out.reshape(N, C_out, H, W)


# ---------------------------------------------------------------------------
# Host-side setup (replicates SVDBlock.SVDfactorize / MuscoSVD.__init__ math)
# ---------------------------------------------------------------------------
def _svd_factorize_np(weight, rank):
    """weight: [C_out, C_in, 1, 1] -> (element_w [R,C_in,1,1], restore_w [C_out,R,1,1])"""
    c_out = weight.shape[0]
    filters = np.transpose(weight.reshape((c_out, -1)))          # [C_in, C_out]
    u, s, v = np.linalg.svd(filters, full_matrices=False)
    if rank is not None:
        s = s[:rank]
    keep = s.shape[0]
    for i in range(s.shape[0]):
        if s[i] <= 0.0:
            keep = i
            break
    keep = max(keep, 1)                                          # guard against R == 0
    s = s[:keep]
    u = u[:, :keep]
    v = v[:keep, :]
    sq = np.sqrt(s)
    u = u * sq[None, :]
    v = v * sq[:, None]
    element_w = u.transpose().reshape(keep, filters.shape[0], 1, 1)   # [R, C_in, 1, 1]
    restore_w = v.transpose().reshape(filters.shape[1], keep, 1, 1)   # [C_out, R, 1, 1]
    return element_w, restore_w


def musco_svd_init(element_w, restore_w, restore_bias, reduction_rate):
    """Replicates MuscoSVD.__init__: merge, pick weakened rank, re-factorize."""
    u = element_w.reshape(element_w.shape[0], -1).transpose()    # [C_in, r]
    v = restore_w.reshape(restore_w.shape[0], -1).transpose()    # [r, C_out]
    weight = np.matmul(u, v)                                     # [C_in, C_out]
    # TODO(synk): original weakened_rank uses VBMF (commented out upstream); the
    # active matrix_rank * (1 - reduction_rate) path is replicated here.
    rank = max(int(np.linalg.matrix_rank(weight, tol=None) * (1.0 - reduction_rate)), 1)
    weight = weight.transpose().reshape(weight.shape[1], weight.shape[0], 1, 1)
    w_el, w_re = _svd_factorize_np(weight, rank)
    return w_el.astype(np.float32), w_re.astype(np.float32), restore_bias.astype(np.float32)


# ---------------------------------------------------------------------------
if __name__ == "__main__":
    # Small shapes: batch=2, C_in=4, C_out=4, spatial=16x16, original SVD rank=3.
    N, C_in, C_out, r0, H, W = 2, 4, 4, 3, 16, 16
    reduction_rate = 0.5

    key = jax.random.PRNGKey(0)
    k1, k2, k3, k4 = jax.random.split(key, 4)

    # Deterministic "pretrained" SVDBlock parameters (element / restore / bias).
    element_w0 = np.asarray(jax.random.normal(k1, (r0, C_in, 1, 1), jnp.float32))
    restore_w0 = np.asarray(jax.random.normal(k2, (C_out, r0, 1, 1), jnp.float32))
    bias0 = np.asarray(jax.random.normal(k3, (C_out,), jnp.float32))

    # MuscoSVD setup (host-side numpy, mirrors PyTorch __init__), then fold the
    # two 1x1 convs once so the forward path is a single pallas_call.
    w_el, w_re, b = musco_svd_init(element_w0, restore_w0, bias0, reduction_rate)
    w_merged, b_col = musco_svd_prepare(w_el, w_re, b)

    # Example input (NCHW).
    x = jax.random.normal(k4, (N, C_in, H, W), jnp.float32)

    out = musco_svd_forward(x, w_merged, b_col)
    out = jax.block_until_ready(out)

    # Reference check: same bf16-quantized operands, f32 math, in numpy.
    def _bf16_round(a):
        return np.asarray(jnp.asarray(a, jnp.bfloat16).astype(jnp.float32))

    R = w_el.shape[0]
    HW = H * W
    W_full = w_re.reshape(C_out, R).astype(np.float32) @ w_el.reshape(R, C_in).astype(np.float32)
    W_q = _bf16_round(W_full)
    x_q = _bf16_round(np.asarray(x)).reshape(N, C_in, HW)
    y_ref = np.einsum("oc,ncs->nos", W_q, x_q).astype(np.float32) + b.reshape(1, C_out, 1)
    y_ref = y_ref.reshape(N, C_out, H, W)

    assert out.shape == (N, C_out, H, W)
    assert np.allclose(np.asarray(out), y_ref, atol=2e-2, rtol=2e-2)
    print("KERNEL_OK")
</pallas_src>

<mosaic_0001>
module attributes {stable_mosaic.version = 11 : i64} {
  func.func @_musco_svd_kernel(%arg0: i32, %arg1: i32, %arg2: memref<1x4x256xf32, #tpu.memory_space<vmem>>, %arg3: memref<4x4xbf16, #tpu.memory_space<vmem>>, %arg4: memref<4x1xf32, #tpu.memory_space<vmem>>, %arg5: memref<1x4x256xf32, #tpu.memory_space<vmem>>) attributes {dimension_semantics = [#tpu.dimension_semantics<parallel>, #tpu.dimension_semantics<parallel>], iteration_bounds = array<i64: 2, 1>, scalar_prefetch = 0 : i64, scratch_operands = 0 : i64, tpu.core_type = #tpu.core_type<tc>, window_params = [{transform_indices = @transform_0, window_bounds = array<i64: 1, 4, 256>}, {pipeline_mode = #tpu.pipeline_mode<synchronous>, transform_indices = @transform_1, window_bounds = array<i64: 4, 4>}, {pipeline_mode = #tpu.pipeline_mode<synchronous>, transform_indices = @transform_2, window_bounds = array<i64: 4, 1>}, {transform_indices = @transform_3, window_bounds = array<i64: 1, 4, 256>}]} {
    %c0 = arith.constant 0 : index
    %c0_0 = arith.constant 0 : index
    %c0_1 = arith.constant 0 : index
    %0 = vector.load %arg2[%c0, %c0_0, %c0_1] : memref<1x4x256xf32, #tpu.memory_space<vmem>>, vector<1x4x256xf32>
    %1 = vector.shape_cast %0 : vector<1x4x256xf32> to vector<4x256xf32>
    %2 = arith.truncf %1 : vector<4x256xf32> to vector<4x256xbf16>
    %c0_2 = arith.constant 0 : index
    %c0_3 = arith.constant 0 : index
    %3 = vector.load %arg3[%c0_2, %c0_3] : memref<4x4xbf16, #tpu.memory_space<vmem>>, vector<4x4xbf16>
    %cst = arith.constant dense<0.000000e+00> : vector<4x256xf32>
    %4 = tpu.matmul %3, %2, %cst {dimension_numbers = #tpu.dot_dimension_numbers<[1], [0], [0], [1], [0, 0, 1, 1], [], []>} : vector<4x4xbf16>, vector<4x256xbf16>, vector<4x256xf32> -> vector<4x256xf32>
    %c0_4 = arith.constant 0 : index
    %c0_5 = arith.constant 0 : index
    %5 = vector.load %arg4[%c0_4, %c0_5] : memref<4x1xf32, #tpu.memory_space<vmem>>, vector<4x1xf32>
    %6 = vector.broadcast %5 : vector<4x1xf32> to vector<4x256xf32>
    %7 = arith.addf %4, %6 : vector<4x256xf32>
    %c0_6 = arith.constant 0 : index
    %c0_7 = arith.constant 0 : index
    %c0_8 = arith.constant 0 : index
    %8 = vector.load %arg5[%c0_6, %c0_7, %c0_8] : memref<1x4x256xf32, #tpu.memory_space<vmem>>, vector<1x4x256xf32>
    %9 = vector.shape_cast %8 : vector<1x4x256xf32> to vector<4x256xf32>
    %10 = vector.shape_cast %7 : vector<4x256xf32> to vector<1x4x256xf32>
    tpu.vector_store %arg5[%c0_6, %c0_7, %c0_8], %10 {strides = array<i32>} : memref<1x4x256xf32, #tpu.memory_space<vmem>>, vector<1x4x256xf32>,
    return
  }
  func.func @transform_0(%arg0: i32, %arg1: i32) -> (i32, i32, i32) {
    %c0_i32 = arith.constant 0 : i32
    %c0_i32_0 = arith.constant 0 : i32
    return %arg0, %c0_i32, %arg1 : i32, i32, i32
  }
  func.func @transform_1(%arg0: i32, %arg1: i32) -> (i32, i32) {
    %c0_i32 = arith.constant 0 : i32
    %c0_i32_0 = arith.constant 0 : i32
    %c0_i32_1 = arith.constant 0 : i32
    return %c0_i32, %c0_i32_0 : i32, i32
  }
  func.func @transform_2(%arg0: i32, %arg1: i32) -> (i32, i32) {
    %c0_i32 = arith.constant 0 : i32
    %c0_i32_0 = arith.constant 0 : i32
    %c0_i32_1 = arith.constant 0 : i32
    return %c0_i32, %c0_i32_0 : i32, i32
  }
  func.func @transform_3(%arg0: i32, %arg1: i32) -> (i32, i32, i32) {
    %c0_i32 = arith.constant 0 : i32
    %c0_i32_0 = arith.constant 0 : i32
    return %arg0, %c0_i32, %arg1 : i32, i32, i32
  }
}

</mosaic_0001>

<llo_original>
// kernel: tpu_custom_call.1
$region0: #{tpu_custom_call.1}
  #allocation0 [shape = 'u32[]', space=smem, size = 0x4, offset = 0x4, fixed_abs, tag = 'smem constant byte address 0x4 - core index']
  #allocation1 [shape = 'u32[144,128]{1,0:T(1,128)}', space=vmem, size = 0x12000, scoped, tag = 'internal scratch']
  %s0 = inlined_call_operand.hbm [shape: f32[2,4,256], index: 0, kind: input, shape index: {}]
  %s1 = inlined_call_operand.vmem [shape: bf16[4,4], index: 1, kind: input, shape index: {}]
  %s2 = inlined_call_operand.vmem [shape: f32[4,1], index: 2, kind: input, shape index: {}]
  %s3 = inlined_call_operand.hbm [shape: f32[2,4,256], index: 3, kind: output, shape index: {}]
  %s4 = sld [smem:[#allocation0]]
  $region49: #{tpu_custom_call.1} parent=0
    _
  %s6 = ssub.s32 1, %s4
  %s7 = scalar_select 0, %s6, %s4
  $region1: #{tpu_custom_call.1} parent=0
    #allocation2 [shape = 'u8[8192]{0}', space=vmem, size = 0x2000, scoped, tag = 'input window, operand 0']
    #allocation3 [shape = 's32[2]{0}', space=sflag, size = 0x8, scoped, tag = 'scoped memory for tpu_custom_call.1']
    #allocation4 [shape = 's32[2]{0}', space=sflag, size = 0x8, scoped, tag = 'scoped memory for tpu_custom_call.1']
    #allocation5 [shape = 'u8[8192]{0}', space=vmem, size = 0x2000, scoped, tag = 'output window, operand 0']
    %8 = vsyncpa [#allocation3], 0
    %s9 = scalar_lea.sflag [#allocation3], 1
    %10 = vsyncpa %s9, 0
    %11 = vsyncpa [#allocation4], 0
    %s12 = scalar_lea.sflag [#allocation4], 1
    %13 = vsyncpa %s12, 0
    loop: start=0, step=1, limit=4
    $region2: #{tpu_custom_call.1} parent=1 // loop_pre_header
      _
    $region3: #{tpu_custom_call.1} parent=1 // loop_header
      %s15 = sphi 0, %s19
      %p16 = scmp.ge.s32.totalorder %s15, 4
      %s22 = sphi 0, %s34
      %s23 = sphi 0, %s30
      %s24 = sphi 0, %s22
      %s25 = sphi 0, %s23
      %s26 = sphi 0, %s24
      %s27 = sphi 0, %s25
      %s39 = sphi 0, %s41
      %s42 = sphi 0, %s39
      %s43 = sphi 0, %s42
      %s59 = sphi 0, %s43
      %s63 = sphi 0, %s63
      %s65 = sphi 0, %s63
      %s66 = sphi 0, %s65
      %s80 = sphi 0, %s66
      %s84 = sphi 0, %s84
      %s86 = sphi 0, %s84
      %s87 = sphi 0, %s86
      %s101 = sphi 0, %s87
      %s109 = sphi 0, %s111
      %s112 = sphi 0, %s109
      %s113 = sphi 0, %s112
      %s129 = sphi 0, %s113
    $region4: #{tpu_custom_call.1} parent=1 // loop_header_branch
      %18 = sbr.rel (%p16) target = $region8
    $region5: #{tpu_custom_call.1} parent=1 // loop_body
      %s20 = ssub.s32 %s15, 1
      %s21 = ssub.s32 %s15, 2
      %s28 = sadd.s32 1, %s23
      %p29 = scmp.ge.s32.totalorder %s28, 1
      %s30 = scalar_select %p29, 0, %s28
      %s31 = sadd.s32 1, %s22
      %s32 = scalar_select %p29, %s31, %s22
      %p33 = scmp.ge.s32.totalorder %s32, 2
      %s34 = scalar_select %p33, 0, %s32
      %s35 = ssub.s32 %s22, %s34
      %s36 = ssub.s32 %s23, %s30
      %s37 = sor.u32 %s35, %s36
      %p38 = scmp.eq.s32.totalorder %s37, 0
      %s40 = sadd.s32 %s39, 1
      %s41 = scalar_select %p38, %s39, %s40
      %p44 = pneg %p38
      %p45 = scmp.eq.s32.totalorder %s15, 1
      %p46 = por %p44, %p45
      %p47 = scmp.ne.s32.totalorder %s39, %s42
      %p48 = scmp.eq.s32.totalorder %s15, 0
      %p49 = por %p47, %p48
      %p50 = scmp.ne.s32.totalorder %s39, %s42
      %p51 = scmp.eq.s32.totalorder %s20, 1
      %p52 = por %p50, %p51
      %p53 = scmp.ne.s32.totalorder %s42, %s43
      %p54 = scmp.eq.s32.totalorder %s20, 0
      %p55 = por %p53, %p54
      %p56 = scmp.ne.s32.totalorder %s42, %s43
      %p57 = scmp.eq.s32.totalorder %s21, 1
      %p58 = por %p56, %p57
      %p60 = scmp.ne.s32.totalorder %s43, %s59
      %p61 = scmp.eq.s32.totalorder %s21, 0
      %p62 = por %p60, %p61
      %s64 = sadd.s32 %s63, 1
      %p67 = scmp.eq.s32.totalorder %s15, 1
      %p68 = scmp.ne.s32.totalorder %s63, %s65
      %p69 = scmp.eq.s32.totalorder %s15, 0
      %p70 = por %p68, %p69
      %p71 = scmp.ne.s32.totalorder %s63, %s65
      %p72 = scmp.eq.s32.totalorder %s20, 1
      %p73 = por %p71, %p72
      %p74 = scmp.ne.s32.totalorder %s65, %s66
      %p75 = scmp.eq.s32.totalorder %s20, 0
      %p76 = por %p74, %p75
      %p77 = scmp.ne.s32.totalorder %s65, %s66
      %p78 = scmp.eq.s32.totalorder %s21, 1
      %p79 = por %p77, %p78
      %p81 = scmp.ne.s32.totalorder %s66, %s80
      %p82 = scmp.eq.s32.totalorder %s21, 0
      %p83 = por %p81, %p82
      %s85 = sadd.s32 %s84, 1
      %p88 = scmp.eq.s32.totalorder %s15, 1
      %p89 = scmp.ne.s32.totalorder %s84, %s86
      %p90 = scmp.eq.s32.totalorder %s15, 0
      %p91 = por %p89, %p90
      %p92 = scmp.ne.s32.totalorder %s84, %s86
      %p93 = scmp.eq.s32.totalorder %s20, 1
      %p94 = por %p92, %p93
      %p95 = scmp.ne.s32.totalorder %s86, %s87
      %p96 = scmp.eq.s32.totalorder %s20, 0
      %p97 = por %p95, %p96
      %p98 = scmp.ne.s32.totalorder %s86, %s87
      %p99 = scmp.eq.s32.totalorder %s21, 1
      %p100 = por %p98, %p99
      %p102 = scmp.ne.s32.totalorder %s87, %s101
      %p103 = scmp.eq.s32.totalorder %s21, 0
      %p104 = por %p102, %p103
      %s105 = ssub.s32 %s22, %s34
      %s106 = ssub.s32 %s23, %s30
      %s107 = sor.u32 %s105, %s106
      %p108 = scmp.eq.s32.totalorder %s107, 0
      %s110 = sadd.s32 %s109, 1
      %s111 = scalar_select %p108, %s109, %s110
      %p114 = pneg %p108
      %p115 = scmp.eq.s32.totalorder %s15, 1
      %p116 = por %p114, %p115
      %p117 = scmp.ne.s32.totalorder %s109, %s112
      %p118 = scmp.eq.s32.totalorder %s15, 0
      %p119 = por %p117, %p118
      %p120 = scmp.ne.s32.totalorder %s109, %s112
      %p121 = scmp.eq.s32.totalorder %s20, 1
      %p122 = por %p120, %p121
      %p123 = scmp.ne.s32.totalorder %s112, %s113
      %p124 = scmp.eq.s32.totalorder %s20, 0
      %p125 = por %p123, %p124
      %p126 = scmp.ne.s32.totalorder %s112, %s113
      %p127 = scmp.eq.s32.totalorder %s21, 1
      %p128 = por %p126, %p127
      %p130 = scmp.ne.s32.totalorder %s113, %s129
      %p131 = scmp.eq.s32.totalorder %s21, 0
      %p132 = por %p130, %p131
      %p133 = scmp.le.s32.totalorder 1, %s15
      %p134 = scmp.lt.s32.totalorder %s15, 3
      %p135 = pnand %p133, %p134
      %p136 = pneg %p135
      // Predicated region
      $region9: #{tpu_custom_call.1} parent=5 // pred_check
        _
      $region10: #{tpu_custom_call.1} parent=5 // pred_check_branch
        %138 = sbr.rel (%p135) target = $region12
      $region11: #{tpu_custom_call.1} parent=5 // pred_region
        %s139 = ssub.s32 %s15, 1
        // Predicated region
        $region13: #{tpu_custom_call.1} parent=11 // pred_check
          %p140 = pneg %p76
        $region14: #{tpu_custom_call.1} parent=11 // pred_check_branch
          %142 = sbr.rel (%p140) target = $region16
        $region15: #{tpu_custom_call.1} parent=11 // pred_region
          _
        $region16: #{tpu_custom_call.1} parent=11 // pred_fallthru
          _
        // Predicated region
        $region17: #{tpu_custom_call.1} parent=11 // pred_check
          %p143 = pneg %p97
        $region18: #{tpu_custom_call.1} parent=11 // pred_check_branch
          %145 = sbr.rel (%p143) target = $region20
        $region19: #{tpu_custom_call.1} parent=11 // pred_region
          _
        $region20: #{tpu_custom_call.1} parent=11 // pred_fallthru
          _
      $region12: #{tpu_custom_call.1} parent=5 // pred_fallthru
        _
      %p146 = scmp.lt.s32.totalorder %s15, 2
      // Predicated region
      $region21: #{tpu_custom_call.1} parent=5 // pred_check
        %p147 = pneg %p146
      $region22: #{tpu_custom_call.1} parent=5 // pred_check_branch
        %149 = sbr.rel (%p147) target = $region24
      $region23: #{tpu_custom_call.1} parent=5 // pred_region
        // Predicated region
        $region25: #{tpu_custom_call.1} parent=23 // pred_check
          %p150 = pneg %p49
        $region26: #{tpu_custom_call.1} parent=23 // pred_check_branch
          %152 = sbr.rel (%p150) target = $region28
        $region27: #{tpu_custom_call.1} parent=23 // pred_region
          %s153 = sand.u32 %s39, 1
          %s154 = scalar_lea.sflag [#allocation3], %s153
          %s155 = sand.u32 %s39, 1
          %s156 = smul.addr %s155, 8
          %s157 = scalar_lea.vmem [#allocation2], %s156
          %s158 = smul.u32 2, %s23
          %s160 = ssub.s32 128, 128
          %161 = vsyncadd %s154, %s160
          %s162 = smul.addr %s22, 2
          %s163 = sadd.s32 %s158, %s162
          %s164 = smul.addr %s163, 64
          %s165 = scalar_lea.hbm %s0, %s164
          %s167 = sshll.u32 %s157, 4
          %s168 = int_to_ptr.vmem [resolvable:$true] %s167
          %170 = dma.hbm_to_vmem [thread:$0]  %s165, 128, %s168, %s154
        $region28: #{tpu_custom_call.1} parent=23 // pred_fallthru
          _
      $region24: #{tpu_custom_call.1} parent=5 // pred_fallthru
        _
      %p171 = scmp.le.s32.totalorder 1, %s15
      %p172 = scmp.lt.s32.totalorder %s15, 3
      %p173 = pnand %p171, %p172
      %p174 = pneg %p173
      // Predicated region
      $region29: #{tpu_custom_call.1} parent=5 // pred_check
        _
      $region30: #{tpu_custom_call.1} parent=5 // pred_check_branch
        %176 = sbr.rel (%p173) target = $region32
      $region31: #{tpu_custom_call.1} parent=5 // pred_region
        %s177 = ssub.s32 %s15, 1
        %s178 = sand.u32 %s42, 1
        %s179 = scalar_lea.sflag [#allocation3], %s178
        %s180 = sand.u32 %s42, 1
        %s181 = smul.addr %s180, 8
        %s182 = scalar_lea.vmem [#allocation2], %s181
        // Predicated region
        $region33: #{tpu_custom_call.1} parent=31 // pred_check
          %p183 = pneg %p55
        $region34: #{tpu_custom_call.1} parent=31 // pred_check_branch
          %185 = sbr.rel (%p183) target = $region36
        $region35: #{tpu_custom_call.1} parent=31 // pred_region
          %186 = dma.done %s179, 128
        $region36: #{tpu_custom_call.1} parent=31 // pred_fallthru
          _
        %s187 = sand.u32 %s42, 1
        %s188 = scalar_lea.sflag [#allocation3], %s187
        %s189 = sand.u32 %s42, 1
        %s190 = smul.addr %s189, 8
        %s191 = scalar_lea.vmem [#allocation2], %s190
        %p192 = pneg %p55
        %p193 = pneg %p52
        %p194 = pneg %p76
        %p195 = pneg %p73
        %p196 = pneg %p97
        %p197 = pneg %p94
        %p198 = pneg %p125
        %p199 = pneg %p122
        %s200 = sand.u32 %s112, 1
        %s201 = scalar_lea.sflag [#allocation4], %s200
        %s202 = sand.u32 %s112, 1
        %s203 = smul.addr %s202, 8
        %s204 = scalar_lea.vmem [#allocation5], %s203
        %s205 = smul.u32 2, %s25
        %s206 = smul.u32 2, %s25
        %v208 = vld [vmem:[%s182] sm:$0xff]
        %v210 = vcombine.high %v208, %v208
        %v212 = vpack.c.bf16 %v208, %v208
        %v213 = vpack.c.bf16 %v210, %v210
        %v214 = vld [vmem:[%s1] sm:$0x3]
        %v215 = vld [vmem:[%s2] sm:$0xf]
        %217 = vset.pattern.permute.xlu0 0
        %218 = vperm.xlu0 %217, %v215
        %v219 = vpop.permute.xlu0 %218
        %vm221 = vcmask 31744
        %v223 = vsel %vm221, %v214, 0
        %vm225 = vcmask 1041408
        %v227 = vsel %vm225, %v212, 0
        %v230 = vsel %vm225, %v213, 0
        %232 = vmatprep.subr.bf16.mxu0 %v230
        %233 = vmatpush1.bf16.msra.mxu0 %v227
        %234 = vmatprep.subr.bf16.mxu0 0
        %235 = vmatpush1.bf16.msra.mxu0 0
        %236 = vmatprep.subr.bf16.mxu0 0
        %237 = vmatpush1.bf16.msra.mxu0 0
        %238 = vmatprep.subr.bf16.mxu0 0
        %239 = vmatpush1.bf16.msra.mxu0 0
        %240 = vmatprep.subr.bf16.mxu0 0
        %241 = vmatpush1.bf16.msra.mxu0 0
        %242 = vmatprep.subr.bf16.mxu0 0
        %243 = vmatpush1.bf16.msra.mxu0 0
        %244 = vmatprep.subr.bf16.mxu0 0
        %245 = vmatpush1.bf16.msra.mxu0 0
        %246 = vmatprep.subr.bf16.mxu0 0
        %247 = vmatpush1.bf16.msra.mxu0 0
        %248 = vmatprep.subr.bf16.mxu0 0
        %249 = vmatpush1.bf16.msra.mxu0 0
        %250 = vmatprep.subr.bf16.mxu0 0
        %251 = vmatpush1.bf16.msra.mxu0 0
        %252 = vmatprep.subr.bf16.mxu0 0
        %253 = vmatpush1.bf16.msra.mxu0 0
        %254 = vmatprep.subr.bf16.mxu0 0
        %255 = vmatpush1.bf16.msra.mxu0 0
        %256 = vmatprep.subr.bf16.mxu0 0
        %257 = vmatpush1.bf16.msra.mxu0 0
        %258 = vmatprep.subr.bf16.mxu0 0
        %259 = vmatpush1.bf16.msra.mxu0 0
        %260 = vmatprep.subr.bf16.mxu0 0
        %261 = vmatpush1.bf16.msra.mxu0 0
        %262 = vmatprep.subr.bf16.mxu0 0
        %263 = vmatpush1.bf16.msra.mxu0 0
        %264 = vmatprep.mubr.bf16.mxu0 0
        %265 = vmatmul.mubr.bf16.gmra.mrb[0].mxu0 %v223
        %v266 = vpop.f32.mrb[0].mxu0
        %v267 = vadd.f32 %v219, %v266
        %v268 = vpop.f32.mrb[0].mxu0
        %v269 = vadd.f32 %v219, %v268
        %v270 = vpop.f32.mrb[0].mxu0
        %v271 = vpop.f32.mrb[0].mxu0
        %272 = vdwg.mxu0
        %v275 = vcombine.low %v267, %v269
        %277 = vst [vmem:[%s204] sm:$0xff] %v275
        %s278 = sand.u32 %s112, 1
        %s279 = scalar_lea.sflag [#allocation4], %s278
        %s280 = sand.u32 %s112, 1
        %s281 = smul.addr %s280, 8
        %s282 = scalar_lea.vmem [#allocation5], %s281
        // Predicated region
        $region37: #{tpu_custom_call.1} parent=31 // pred_check
          %p283 = pneg %p122
        $region38: #{tpu_custom_call.1} parent=31 // pred_check_branch
          %285 = sbr.rel (%p283) target = $region40
        $region39: #{tpu_custom_call.1} parent=31 // pred_region
          %s286 = smul.u32 2, %s25
          %s288 = ssub.s32 128, 128
          %289 = vsyncadd %s279, %s288
          %s290 = smul.addr %s24, 2
          %s291 = sadd.s32 %s286, %s290
          %s292 = smul.addr %s291, 64
          %s293 = scalar_lea.hbm %s3, %s292
          %s295 = sshll.u32 %s282, 4
          %s296 = int_to_ptr.vmem [resolvable:$true] %s295
          %298 = dma.vmem_to_hbm [thread:$0]  %s296, 128, %s293, %s279
        $region40: #{tpu_custom_call.1} parent=31 // pred_fallthru
          _
      $region32: #{tpu_custom_call.1} parent=5 // pred_fallthru
        _
      %p299 = scmp.le.s32.totalorder 2, %s15
      // Predicated region
      $region41: #{tpu_custom_call.1} parent=5 // pred_check
        %p300 = pneg %p299
      $region42: #{tpu_custom_call.1} parent=5 // pred_check_branch
        %302 = sbr.rel (%p300) target = $region44
      $region43: #{tpu_custom_call.1} parent=5 // pred_region
        %s303 = ssub.s32 %s15, 2
        // Predicated region
        $region45: #{tpu_custom_call.1} parent=43 // pred_check
          %p304 = pneg %p128
        $region46: #{tpu_custom_call.1} parent=43 // pred_check_branch
          %306 = sbr.rel (%p304) target = $region48
        $region47: #{tpu_custom_call.1} parent=43 // pred_region
          %s307 = sand.u32 %s113, 1
          %s308 = scalar_lea.sflag [#allocation4], %s307
          %s309 = sand.u32 %s113, 1
          %s310 = smul.addr %s309, 8
          %s311 = scalar_lea.vmem [#allocation5], %s310
          %312 = dma.done %s308, 128
        $region48: #{tpu_custom_call.1} parent=43 // pred_fallthru
          _
      $region44: #{tpu_custom_call.1} parent=5 // pred_fallthru
        _
    $region6: #{tpu_custom_call.1} parent=1 // loop_footer
      %s19 = sadd.s32 1, %s15
    $region7: #{tpu_custom_call.1} parent=1 // loop_footer_branch
      %14 = sbr.rel target = $region3
    $region8: #{tpu_custom_call.1} parent=1 // loop_exit
      _
    %313 = vsyncpa [#allocation3], 1
    %s314 = scalar_lea.sflag [#allocation3], 1
    %315 = vsyncpa %s314, 1
    %316 = vsyncpa [#allocation4], 1
    %s317 = scalar_lea.sflag [#allocation4], 1
    %318 = vsyncpa %s317, 1

</llo_original>
